<compile_context>
chip_gen: v7x
topology: tpu7x:2x2x1
jax: 0.10.0
libtpu: 0.0.40
codegen_flags: <defaults>
</compile_context>

<pallas_src>
import functools
import inspect
from typing import NamedTuple

import jax
import jax.numpy as jnp
from jax.experimental import pallas as pl
from jax.experimental.pallas import tpu as pltpu


def _round_up(x, m):
    return (x + m - 1) // m * m


# ---------------------------------------------------------------------------
# Static capability / hardware queries (no runtime compile probing).
# ---------------------------------------------------------------------------
def _supports_pipeline_mode():
    if not hasattr(pl, "Buffered"):
        return False
    try:
        return "pipeline_mode" in inspect.signature(pl.BlockSpec).parameters
    except (TypeError, ValueError):
        return False


# Single-buffer grid-invariant weight blocks (halves their VMEM footprint, which is
# what matters on v7x). Static decision; flip to False to force default buffering.
SINGLE_BUFFER_WEIGHTS = _supports_pipeline_mode()


@functools.lru_cache(maxsize=1)
def _physical_vmem_bytes():
    # Generation-aware ceiling: 64 MiB/TC on v7x, 128 MiB on v5e/v6e.
    try:
        return int(pltpu.get_tpu_info().vmem_capacity_bytes)
    except Exception:  # non-TPU backend / very old jax: conservative fallback
        return 64 << 20


# ---------------------------------------------------------------------------
# Kernels
# ---------------------------------------------------------------------------
def _silu_f32(h):
    # SiLU in f32. exp lands on the EUP; the divide is an approx reciprocal on the
    # EUP slot instead of the VALU (free when the kernel is VPU-slot bound).
    return h * pl.reciprocal(1.0 + jnp.exp(-h), approx=True)


def _mlp_kernel(x_ref, w1_ref, b1_ref, w2_ref, b2_ref, o_ref):
    # Single-chunk path: whole mid dim resident in VMEM.
    x = x_ref[...].astype(w1_ref.dtype)             # in-kernel cast (no HBM pass)
    h = jnp.dot(x, w1_ref[...], preferred_element_type=jnp.float32)
    h = h + b1_ref[...].astype(jnp.float32)
    h = _silu_f32(h)
    y = jnp.dot(h.astype(w2_ref.dtype), w2_ref[...],
                preferred_element_type=jnp.float32)
    y = y + b2_ref[...].astype(jnp.float32)
    o_ref[...] = y.astype(o_ref.dtype)


def _mlp_kernel_chunked(x_ref, w1_ref, b1_ref, w2_ref, b2_ref, o_ref, acc_ref):
    # Mid-dim chunked path: grid = (M parallel, mid arbitrary); f32 accumulator in
    # VMEM persists across mid chunks, bias2 + cast applied on the last chunk.
    k = pl.program_id(1)

    @pl.when(k == 0)
    def _():
        acc_ref[...] = jnp.zeros_like(acc_ref)

    x = x_ref[...].astype(w1_ref.dtype)
    h = jnp.dot(x, w1_ref[...], preferred_element_type=jnp.float32)
    h = h + b1_ref[...].astype(jnp.float32)
    h = _silu_f32(h)
    acc_ref[...] += jnp.dot(h.astype(w2_ref.dtype), w2_ref[...],
                            preferred_element_type=jnp.float32)

    @pl.when(k == pl.num_programs(1) - 1)
    def _():
        o_ref[...] = (acc_ref[...] + b2_ref[...].astype(jnp.float32)
                      ).astype(o_ref.dtype)


# ---------------------------------------------------------------------------
# pallas_call construction
# ---------------------------------------------------------------------------
def _resident_spec(shape, index_map):
    # Grid-invariant block: request a single VMEM buffer when supported.
    if SINGLE_BUFFER_WEIGHTS:
        return pl.BlockSpec(shape, index_map, pipeline_mode=pl.Buffered(1))
    return pl.BlockSpec(shape, index_map)


def _build_call(n_pad, in_dim, mid_pad, out_pad, block_m, chunk_mid,
                x_dtype, out_dtype, compute_dtype, vmem_limit):
    nk = mid_pad // chunk_mid
    cbytes = jnp.dtype(compute_dtype).itemsize
    obytes = jnp.dtype(out_dtype).itemsize
    xbytes = jnp.dtype(x_dtype).itemsize

    flops = 2 * n_pad * in_dim * mid_pad + 2 * n_pad * mid_pad * out_pad
    bytes_accessed = (n_pad * in_dim * xbytes
                      + (in_dim * mid_pad + mid_pad * out_pad) * cbytes
                      + (mid_pad + out_pad) * 4
                      + n_pad * out_pad * obytes)
    cost = pl.CostEstimate(flops=int(flops),
                           transcendentals=int(n_pad * mid_pad),
                           bytes_accessed=int(bytes_accessed))

    if nk == 1:
        kernel = _mlp_kernel
        grid = (n_pad // block_m,)
        in_specs = [
            pl.BlockSpec((block_m, in_dim), lambda i: (i, 0)),   # x row tile
            _resident_spec((in_dim, mid_pad), lambda i: (0, 0)),  # w1 (resident)
            _resident_spec((1, mid_pad), lambda i: (0, 0)),       # b1
            _resident_spec((mid_pad, out_pad), lambda i: (0, 0)),  # w2 (resident)
            _resident_spec((1, out_pad), lambda i: (0, 0)),        # b2
        ]
        out_specs = pl.BlockSpec((block_m, out_pad), lambda i: (i, 0))
        scratch = []
        semantics = ("parallel",)
    else:
        kernel = _mlp_kernel_chunked
        grid = (n_pad // block_m, nk)
        in_specs = [
            pl.BlockSpec((block_m, in_dim), lambda i, k: (i, 0)),      # x (const over k)
            pl.BlockSpec((in_dim, chunk_mid), lambda i, k: (0, k)),    # w1 chunk
            pl.BlockSpec((1, chunk_mid), lambda i, k: (0, k)),         # b1 chunk
            pl.BlockSpec((chunk_mid, out_pad), lambda i, k: (k, 0)),   # w2 chunk
            _resident_spec((1, out_pad), lambda i, k: (0, 0)),         # b2 (resident)
        ]
        out_specs = pl.BlockSpec((block_m, out_pad), lambda i, k: (i, 0))
        scratch = [pltpu.VMEM((block_m, out_pad), jnp.float32)]
        semantics = ("parallel", "arbitrary")

    return pl.pallas_call(
        kernel,
        out_shape=jax.ShapeDtypeStruct((n_pad, out_pad), out_dtype),
        grid_spec=pltpu.PrefetchScalarGridSpec(
            num_scalar_prefetch=0,
            grid=grid,
            in_specs=in_specs,
            out_specs=out_specs,
            scratch_shapes=scratch,
        ),
        compiler_params=pltpu.CompilerParams(
            dimension_semantics=semantics,
            vmem_limit_bytes=int(vmem_limit),
        ),
        cost_estimate=cost,
    )


@functools.partial(jax.jit,
                   static_argnames=("block_m", "chunk_mid", "vmem_limit"))
def _mlp_pallas_padded(x, w1, b1, w2, b2, *, block_m, chunk_mid, vmem_limit):
    n_pad, in_dim = x.shape
    mid_pad = w1.shape[1]
    out_pad = w2.shape[1]
    call = _build_call(n_pad, in_dim, mid_pad, out_pad, block_m, chunk_mid,
                       x.dtype, x.dtype, w1.dtype, vmem_limit)
    return call(x, w1, b1, w2, b2)


# ---------------------------------------------------------------------------
# Tiling heuristics
# ---------------------------------------------------------------------------
def _choose_block_m(n, max_block_m=256):
    # 16 = bf16 sublane pack; avoid padding tiny batches up to 256 rows.
    bm = min(max_block_m, _round_up(max(n, 1), 16))
    # Ensure >= 2 grid steps for larger n so the parallel M axis can actually
    # shard across v7x's 2 TensorCores.
    if n > 16:
        bm = min(bm, _round_up(pl.cdiv(n, 2), 16))
    return max(bm, 16)


def _vmem_needed(block_m, in_dim, out_pad, chunk, nk, xbytes, cbytes, obytes):
    wbuf = 1 if (nk == 1 and SINGLE_BUFFER_WEIGHTS) else 2
    return (2 * block_m * in_dim * xbytes                         # x tiles (2-buf)
            + 2 * block_m * out_pad * obytes                      # out tiles (2-buf)
            + wbuf * (in_dim * chunk + chunk * out_pad) * cbytes  # w1 + w2
            + wbuf * chunk * 4                                    # b1 (f32)
            + out_pad * 4                                         # b2 (resident)
            + 6 * block_m * chunk                                 # f32 h + bf16 h copy
            + (block_m * out_pad * 4 if nk > 1 else 0))           # accumulator scratch


def _choose_chunk(block_m, in_dim, mid_pad, out_pad, xbytes, cbytes, obytes, budget):
    # Largest mid chunk (multiple of 128 dividing mid_pad) whose VMEM estimate fits.
    m = mid_pad // 128
    divisors = sorted({d for d in range(1, m + 1) if m % d == 0}, reverse=True)
    for d in divisors:
        chunk = 128 * d
        nk = mid_pad // chunk
        if _vmem_needed(block_m, in_dim, out_pad, chunk, nk,
                        xbytes, cbytes, obytes) <= budget:
            return chunk
    # TODO(synk): if even a 128-wide mid chunk does not fit, also shrink block_m.
    return 128


# ---------------------------------------------------------------------------
# Public API
# ---------------------------------------------------------------------------
class PreparedMLPParams(NamedTuple):
    w1: jax.Array    # [in_dim, mid_pad]   compute_dtype
    b1: jax.Array    # [1, mid_pad]        float32
    w2: jax.Array    # [mid_pad, out_pad]  compute_dtype
    b2: jax.Array    # [1, out_pad]        float32
    out_dim: int


def prepare_mlp_params(w1, b1, w2, b2, compute_dtype=jnp.bfloat16):
    """One-time weight preparation (cast + lane padding), hoisted off the hot path."""
    in_dim, mid_dim = w1.shape
    out_dim = w2.shape[1]
    mid_pad = _round_up(mid_dim, 128)
    out_pad = _round_up(out_dim, 128)

    b1 = jnp.reshape(b1, (1, mid_dim)).astype(jnp.float32)
    b2 = jnp.reshape(b2, (1, out_dim)).astype(jnp.float32)
    w1 = w1.astype(compute_dtype)
    w2 = w2.astype(compute_dtype)
    if mid_pad != mid_dim:
        w1 = jnp.pad(w1, ((0, 0), (0, mid_pad - mid_dim)))
        b1 = jnp.pad(b1, ((0, 0), (0, mid_pad - mid_dim)))
        w2 = jnp.pad(w2, ((0, mid_pad - mid_dim), (0, 0)))
    if out_pad != out_dim:
        w2 = jnp.pad(w2, ((0, 0), (0, out_pad - out_dim)))
        b2 = jnp.pad(b2, ((0, 0), (0, out_pad - out_dim)))
    return PreparedMLPParams(w1, b1, w2, b2, int(out_dim))


def mlp_pallas(x, params: PreparedMLPParams, *, max_block_m=256):
    """Fused MLP forward: SiLU(x @ w1 + b1) @ w2 + b2 (matches the PyTorch module)."""
    w1, b1, w2, b2, out_dim = params
    in_dim, mid_pad = w1.shape
    out_pad = w2.shape[1]
    assert x.shape[-1] == in_dim, (x.shape, in_dim)
    lead = x.shape[:-1]

    x2 = x.reshape(-1, in_dim)
    n = x2.shape[0]

    block_m = _choose_block_m(n, max_block_m)
    n_pad = _round_up(max(n, 1), block_m)
    if n_pad != n:
        x2 = jnp.pad(x2, ((0, n_pad - n), (0, 0)))

    xbytes = jnp.dtype(x2.dtype).itemsize
    cbytes = jnp.dtype(w1.dtype).itemsize
    obytes = xbytes
    budget = int(_physical_vmem_bytes() * 0.85)
    chunk = _choose_chunk(block_m, in_dim, mid_pad, out_pad,
                          xbytes, cbytes, obytes, budget)
    nk = mid_pad // chunk
    need = _vmem_needed(block_m, in_dim, out_pad, chunk, nk, xbytes, cbytes, obytes)
    vmem_limit = int(min(max(int(need * 1.5), 32 << 20), budget))

    out = _mlp_pallas_padded(x2, w1, b1, w2, b2, block_m=block_m,
                             chunk_mid=chunk, vmem_limit=vmem_limit)
    out = out[:n, :out_dim]
    return out.reshape(*lead, out_dim)


def mlp_pallas_raw(x, w1, b1, w2, b2, *, compute_dtype=jnp.bfloat16, max_block_m=256):
    """Convenience wrapper for un-prepared (f32, unpadded) weights."""
    return mlp_pallas(x, prepare_mlp_params(w1, b1, w2, b2, compute_dtype),
                      max_block_m=max_block_m)


# ---------------------------------------------------------------------------
# Reference / init / test
# ---------------------------------------------------------------------------
def init_mlp_params(key, in_dim, out_dim, mid_dim=128, dtype=jnp.float32):
    """Deterministic init mimicking nn.Linear's uniform(-1/sqrt(fan_in), +1/sqrt(fan_in))."""
    k1, k2, k3, k4 = jax.random.split(key, 4)
    bound1 = 1.0 / jnp.sqrt(in_dim)
    bound2 = 1.0 / jnp.sqrt(mid_dim)
    w1 = jax.random.uniform(k1, (in_dim, mid_dim), dtype, -bound1, bound1)
    b1 = jax.random.uniform(k2, (1, mid_dim), dtype, -bound1, bound1)
    w2 = jax.random.uniform(k3, (mid_dim, out_dim), dtype, -bound2, bound2)
    b2 = jax.random.uniform(k4, (1, out_dim), dtype, -bound2, bound2)
    return w1, b1, w2, b2


def mlp_reference(x, w1, b1, w2, b2, compute_dtype=jnp.float32):
    """Pure-JAX reference; compute_dtype mimics the kernel's MXU input dtype."""
    b1 = jnp.reshape(b1, (1, -1)).astype(jnp.float32)
    b2 = jnp.reshape(b2, (1, -1)).astype(jnp.float32)
    shape = x.shape[:-1] + (w2.shape[1],)
    x2 = x.reshape(-1, x.shape[-1])
    h = jnp.dot(x2.astype(compute_dtype), w1.astype(compute_dtype),
                preferred_element_type=jnp.float32) + b1
    h = h * jax.nn.sigmoid(h)
    y = jnp.dot(h.astype(compute_dtype), w2.astype(compute_dtype),
                preferred_element_type=jnp.float32) + b2
    return y.astype(x.dtype).reshape(shape)


if __name__ == "__main__":
    key = jax.random.PRNGKey(0)
    kx, kx3, kp = jax.random.split(key, 3)

    batch, in_dim, mid_dim, out_dim = 8, 32, 128, 64
    x = jax.random.normal(kx, (batch, in_dim), jnp.float32)
    w1, b1, w2, b2 = init_mlp_params(kp, in_dim, out_dim, mid_dim)

    # One-time weight prep (hoisted off the per-call path).
    params = prepare_mlp_params(w1, b1, w2, b2)

    out = jax.block_until_ready(mlp_pallas(x, params))
    assert out.shape == (batch, out_dim), out.shape

    # Reference with the same numerics as the kernel (bf16 MXU inputs, f32 accum).
    ref_bf16 = mlp_reference(x, w1, b1, w2, b2, compute_dtype=jnp.bfloat16)
    err_bf16 = float(jnp.max(jnp.abs(out - ref_bf16)))
    assert err_bf16 < 5e-3, f"bf16-consistent mismatch: {err_bf16}"

    # Module-semantics (f32) reference with bf16-appropriate tolerance.
    ref_f32 = mlp_reference(x, w1, b1, w2, b2, compute_dtype=jnp.float32)
    err_f32 = float(jnp.max(jnp.abs(out - ref_f32)))
    assert err_f32 < 3e-2, f"f32 reference mismatch: {err_f32}"

    # Exercise leading dims + row padding path (n=10 -> padded to 16 rows).
    x3 = jax.random.normal(kx3, (2, 5, in_dim), jnp.float32)
    out3 = jax.block_until_ready(mlp_pallas(x3, params))
    assert out3.shape == (2, 5, out_dim), out3.shape
    ref3 = mlp_reference(x3, w1, b1, w2, b2, compute_dtype=jnp.bfloat16)
    err3 = float(jnp.max(jnp.abs(out3 - ref3)))
    assert err3 < 5e-3, f"3-D input mismatch: {err3}"

    print("KERNEL_OK")
</pallas_src>

<mosaic_0001>
module attributes {stable_mosaic.version = 11 : i64} {
  func.func @_mlp_kernel(%arg0: i32, %arg1: memref<16x32xf32, #tpu.memory_space<vmem>>, %arg2: memref<32x128xbf16, #tpu.memory_space<vmem>>, %arg3: memref<1x128xf32, #tpu.memory_space<vmem>>, %arg4: memref<128x128xbf16, #tpu.memory_space<vmem>>, %arg5: memref<1x128xf32, #tpu.memory_space<vmem>>, %arg6: memref<16x128xf32, #tpu.memory_space<vmem>>) attributes {dimension_semantics = [#tpu.dimension_semantics<parallel>], iteration_bounds = array<i64: 1>, scalar_prefetch = 0 : i64, scratch_operands = 0 : i64, tpu.core_type = #tpu.core_type<tc>, window_params = [{transform_indices = @transform_0, window_bounds = array<i64: 16, 32>}, {pipeline_mode = #tpu.pipeline_mode<synchronous>, transform_indices = @transform_1, window_bounds = array<i64: 32, 128>}, {pipeline_mode = #tpu.pipeline_mode<synchronous>, transform_indices = @transform_2, window_bounds = array<i64: 1, 128>}, {pipeline_mode = #tpu.pipeline_mode<synchronous>, transform_indices = @transform_3, window_bounds = array<i64: 128, 128>}, {pipeline_mode = #tpu.pipeline_mode<synchronous>, transform_indices = @transform_4, window_bounds = array<i64: 1, 128>}, {transform_indices = @transform_5, window_bounds = array<i64: 16, 128>}]} {
    %c0 = arith.constant 0 : index
    %c0_0 = arith.constant 0 : index
    %0 = vector.load %arg1[%c0, %c0_0] : memref<16x32xf32, #tpu.memory_space<vmem>>, vector<16x32xf32>
    %1 = arith.truncf %0 : vector<16x32xf32> to vector<16x32xbf16>
    %c0_1 = arith.constant 0 : index
    %c0_2 = arith.constant 0 : index
    %2 = vector.load %arg2[%c0_1, %c0_2] : memref<32x128xbf16, #tpu.memory_space<vmem>>, vector<32x128xbf16>
    %cst = arith.constant dense<0.000000e+00> : vector<16x128xf32>
    %3 = tpu.matmul %1, %2, %cst {dimension_numbers = #tpu.dot_dimension_numbers<[1], [0], [0], [1], [0, 0, 1, 1], [], []>} : vector<16x32xbf16>, vector<32x128xbf16>, vector<16x128xf32> -> vector<16x128xf32>
    %c0_3 = arith.constant 0 : index
    %c0_4 = arith.constant 0 : index
    %4 = vector.load %arg3[%c0_3, %c0_4] : memref<1x128xf32, #tpu.memory_space<vmem>>, vector<1x128xf32>
    %5 = vector.broadcast %4 : vector<1x128xf32> to vector<16x128xf32>
    %6 = arith.addf %3, %5 : vector<16x128xf32>
    %cst_5 = arith.constant 0.000000e+00 : f32
    %7 = vector.broadcast %cst_5 : f32 to vector<16x128xf32>
    %8 = arith.subf %7, %6 : vector<16x128xf32>
    %9 = math.exp %8 : vector<16x128xf32>
    %cst_6 = arith.constant 1.000000e+00 : f32
    %10 = vector.broadcast %cst_6 : f32 to vector<16x128xf32>
    %11 = arith.addf %10, %9 : vector<16x128xf32>
    %12 = tpu.reciprocal %11 {approx = true} : vector<16x128xf32> -> vector<16x128xf32>
    %13 = arith.mulf %6, %12 : vector<16x128xf32>
    %14 = arith.truncf %13 : vector<16x128xf32> to vector<16x128xbf16>
    %c0_7 = arith.constant 0 : index
    %c0_8 = arith.constant 0 : index
    %15 = vector.load %arg4[%c0_7, %c0_8] : memref<128x128xbf16, #tpu.memory_space<vmem>>, vector<128x128xbf16>
    %cst_9 = arith.constant dense<0.000000e+00> : vector<16x128xf32>
    %16 = tpu.matmul %14, %15, %cst_9 {dimension_numbers = #tpu.dot_dimension_numbers<[1], [0], [0], [1], [0, 0, 1, 1], [], []>} : vector<16x128xbf16>, vector<128x128xbf16>, vector<16x128xf32> -> vector<16x128xf32>
    %c0_10 = arith.constant 0 : index
    %c0_11 = arith.constant 0 : index
    %17 = vector.load %arg5[%c0_10, %c0_11] : memref<1x128xf32, #tpu.memory_space<vmem>>, vector<1x128xf32>
    %18 = vector.broadcast %17 : vector<1x128xf32> to vector<16x128xf32>
    %19 = arith.addf %16, %18 : vector<16x128xf32>
    %c0_12 = arith.constant 0 : index
    %c0_13 = arith.constant 0 : index
    %20 = vector.load %arg6[%c0_12, %c0_13] : memref<16x128xf32, #tpu.memory_space<vmem>>, vector<16x128xf32>
    tpu.vector_store %arg6[%c0_12, %c0_13], %19 {strides = array<i32>} : memref<16x128xf32, #tpu.memory_space<vmem>>, vector<16x128xf32>,
    return
  }
  func.func @transform_0(%arg0: i32) -> (i32, i32) {
    %c0_i32 = arith.constant 0 : i32
    %c0_i32_0 = arith.constant 0 : i32
    return %arg0, %c0_i32 : i32, i32
  }
  func.func @transform_1(%arg0: i32) -> (i32, i32) {
    %c0_i32 = arith.constant 0 : i32
    %c0_i32_0 = arith.constant 0 : i32
    %c0_i32_1 = arith.constant 0 : i32
    return %c0_i32, %c0_i32_0 : i32, i32
  }
  func.func @transform_2(%arg0: i32) -> (i32, i32) {
    %c0_i32 = arith.constant 0 : i32
    %c0_i32_0 = arith.constant 0 : i32
    %c0_i32_1 = arith.constant 0 : i32
    return %c0_i32, %c0_i32_0 : i32, i32
  }
  func.func @transform_3(%arg0: i32) -> (i32, i32) {
    %c0_i32 = arith.constant 0 : i32
    %c0_i32_0 = arith.constant 0 : i32
    %c0_i32_1 = arith.constant 0 : i32
    return %c0_i32, %c0_i32_0 : i32, i32
  }
  func.func @transform_4(%arg0: i32) -> (i32, i32) {
    %c0_i32 = arith.constant 0 : i32
    %c0_i32_0 = arith.constant 0 : i32
    %c0_i32_1 = arith.constant 0 : i32
    return %c0_i32, %c0_i32_0 : i32, i32
  }
  func.func @transform_5(%arg0: i32) -> (i32, i32) {
    %c0_i32 = arith.constant 0 : i32
    %c0_i32_0 = arith.constant 0 : i32
    return %arg0, %c0_i32 : i32, i32
  }
}

</mosaic_0001>

<llo_original>
// kernel: _mlp_pallas_padded.1
$region0: #{_mlp_pallas_padded.1}
  #allocation0 [shape = 'u32[]', space=smem, size = 0x4, offset = 0x4, fixed_abs, tag = 'smem constant byte address 0x4 - core index']
  #allocation1 [shape = 'u32[144,128]{1,0:T(1,128)}', space=vmem, size = 0x12000, scoped, tag = 'internal scratch']
  %s0 = inlined_call_operand.hbm [shape: f32[16,32], index: 0, kind: input, shape index: {}]
  %s1 = inlined_call_operand.hbm [shape: bf16[32,128], index: 1, kind: input, shape index: {}]
  %s2 = inlined_call_operand.vmem [shape: f32[1,128], index: 2, kind: input, shape index: {}]
  %s3 = inlined_call_operand.hbm [shape: bf16[128,128], index: 3, kind: input, shape index: {}]
  %s4 = inlined_call_operand.vmem [shape: f32[1,128], index: 4, kind: input, shape index: {}]
  %s5 = inlined_call_operand.hbm [shape: f32[16,128], index: 5, kind: output, shape index: {}]
  %s6 = sld [smem:[#allocation0]]
  $region42: #{_mlp_pallas_padded.1} parent=0
    _
  %s8 = ssub.s32 1, %s6
  %s9 = scalar_select 0, %s8, %s6
  $region1: #{_mlp_pallas_padded.1} parent=0
    #allocation2 [shape = 'u8[8192]{0}', space=vmem, size = 0x2000, scoped, tag = 'input window, operand 0, single buffered']
    #allocation3 [shape = 's32[1]{0}', space=sflag, size = 0x4, scoped, tag = 'scoped memory for _mlp_pallas_padded.1']
    #allocation4 [shape = 's32[1]{0}', space=sflag, size = 0x4, scoped, tag = 'scoped memory for _mlp_pallas_padded.1']
    #allocation5 [shape = 'u8[8192]{0}', space=vmem, size = 0x2000, scoped, tag = 'input window, operand 1, single buffered']
    #allocation6 [shape = 's32[1]{0}', space=sflag, size = 0x4, scoped, tag = 'scoped memory for _mlp_pallas_padded.1']
    #allocation7 [shape = 'u8[32768]{0}', space=vmem, size = 0x8000, scoped, tag = 'input window, operand 3, single buffered']
    #allocation8 [shape = 'u8[8192]{0}', space=vmem, size = 0x2000, scoped, tag = 'output window, operand 0, single buffered']
    %10 = vsyncpa [#allocation3], 0
    %11 = vsyncpa [#allocation6], 0
    %12 = vsyncpa [#allocation4], 0
    // Predicated region
    $region2: #{_mlp_pallas_padded.1} parent=1 // pred_check
      _
    $region3: #{_mlp_pallas_padded.1} parent=1 // pred_check_branch
      %14 = sbr.rel (0) target = $region5
    $region4: #{_mlp_pallas_padded.1} parent=1 // pred_region
      %s16 = ssub.s32 256, 256
      %17 = vsyncadd [#allocation3], %s16
      %s18 = sshll.u32 [#allocation2], 4
      %s19 = int_to_ptr.vmem [resolvable:$true] %s18
      %24 = dma.hbm_to_vmem [thread:$0]  %s0, 256, %s19, [#allocation3], 128, 128, 8
    $region5: #{_mlp_pallas_padded.1} parent=1 // pred_fallthru
      _
    // Predicated region
    $region6: #{_mlp_pallas_padded.1} parent=1 // pred_check
      _
    $region7: #{_mlp_pallas_padded.1} parent=1 // pred_check_branch
      %26 = sbr.rel (0) target = $region9
    $region8: #{_mlp_pallas_padded.1} parent=1 // pred_region
      %s28 = ssub.s32 256, 256
      %29 = vsyncadd [#allocation6], %s28
      %s30 = sshll.u32 [#allocation5], 4
      %s31 = int_to_ptr.vmem [resolvable:$true] %s30
      %36 = dma.hbm_to_vmem [thread:$0]  %s1, 256, %s31, [#allocation6], 64, 64, 4
    $region9: #{_mlp_pallas_padded.1} parent=1 // pred_fallthru
      _
    // Predicated region
    $region10: #{_mlp_pallas_padded.1} parent=1 // pred_check
      _
    $region11: #{_mlp_pallas_padded.1} parent=1 // pred_check_branch
      %38 = sbr.rel (0) target = $region13
    $region12: #{_mlp_pallas_padded.1} parent=1 // pred_region
      _
    $region13: #{_mlp_pallas_padded.1} parent=1 // pred_fallthru
      _
    // Predicated region
    $region14: #{_mlp_pallas_padded.1} parent=1 // pred_check
      _
    $region15: #{_mlp_pallas_padded.1} parent=1 // pred_check_branch
      %40 = sbr.rel (0) target = $region17
    $region16: #{_mlp_pallas_padded.1} parent=1 // pred_region
      %s42 = ssub.s32 1024, 1024
      %43 = vsyncadd [#allocation6], %s42
      %s44 = sshll.u32 [#allocation7], 4
      %s45 = int_to_ptr.vmem [resolvable:$true] %s44
      %50 = dma.hbm_to_vmem [thread:$0]  %s3, 1024, %s45, [#allocation6], 64, 64, 4
    $region17: #{_mlp_pallas_padded.1} parent=1 // pred_fallthru
      _
    // Predicated region
    $region18: #{_mlp_pallas_padded.1} parent=1 // pred_check
      _
    $region19: #{_mlp_pallas_padded.1} parent=1 // pred_check_branch
      %52 = sbr.rel (0) target = $region21
    $region20: #{_mlp_pallas_padded.1} parent=1 // pred_region
      _
    $region21: #{_mlp_pallas_padded.1} parent=1 // pred_fallthru
      _
    // Predicated region
    $region22: #{_mlp_pallas_padded.1} parent=1 // pred_check
      _
    $region23: #{_mlp_pallas_padded.1} parent=1 // pred_check_branch
      %54 = sbr.rel (0) target = $region25
    $region24: #{_mlp_pallas_padded.1} parent=1 // pred_region
      %55 = dma.done [#allocation3], 256
    $region25: #{_mlp_pallas_padded.1} parent=1 // pred_fallthru
      _
    // Predicated region
    $region26: #{_mlp_pallas_padded.1} parent=1 // pred_check
      _
    $region27: #{_mlp_pallas_padded.1} parent=1 // pred_check_branch
      %57 = sbr.rel (0) target = $region29
    $region28: #{_mlp_pallas_padded.1} parent=1 // pred_region
      %58 = dma.done [#allocation6], 256
    $region29: #{_mlp_pallas_padded.1} parent=1 // pred_fallthru
      _
    // Predicated region
    $region30: #{_mlp_pallas_padded.1} parent=1 // pred_check
      _
    $region31: #{_mlp_pallas_padded.1} parent=1 // pred_check_branch
      %60 = sbr.rel (0) target = $region33
    $region32: #{_mlp_pallas_padded.1} parent=1 // pred_region
      %61 = dma.done [#allocation6], 1024
    $region33: #{_mlp_pallas_padded.1} parent=1 // pred_fallthru
      _
    %v63 = vld [vmem:[#allocation2] sm:$0xff]
    %v64 = vld [vmem:[#allocation2 + $0x8] sm:$0xff]
    %v65 = vpack.c.bf16 %v64, %v63
    %v66 = vld [vmem:[#allocation5] sm:$0xf]
    %v67 = vld [vmem:[#allocation5 + $0x4] sm:$0xf]
    %v68 = vld [vmem:[#allocation5 + $0x8] sm:$0xf]
    %v69 = vld [vmem:[#allocation5 + $0xc] sm:$0xf]
    %v70 = vld [vmem:[%s2] sm:$0x1]
    %v72 = vlaneseq
    %v73 = vshrl.u32 %v72, 7
    %v74 = vsub.s32 0, %v73
    %v75 = vrot.slane %v70, %v74
    %v81 = vunpack.c.l.b16 %v66
    %v82 = vunpack.c.l.b16 %v67
    %v83 = vunpack.c.l.b16 %v68
    %v84 = vunpack.c.l.b16 %v69
    %v85 = vpack.c.b16 %v82, %v81
    %v86 = vpack.c.b16 %v84, %v83
    %vm89 = vcmask 261120
    %v91 = vsel %vm89, %v65, 0
    %93 = vmatprep.subr.bf16.mxu0 0
    %94 = vmatpush1.bf16.msra.mxu0 %v85
    %95 = vmatprep.subr.bf16.mxu0 0
    %96 = vmatpush1.bf16.msra.mxu0 %v86
    %97 = vmatprep.subr.bf16.mxu0 0
    %98 = vmatpush1.bf16.msra.mxu0 0
    %99 = vmatprep.subr.bf16.mxu0 0
    %100 = vmatpush1.bf16.msra.mxu0 0
    %101 = vmatprep.subr.bf16.mxu0 0
    %102 = vmatpush1.bf16.msra.mxu0 0
    %103 = vmatprep.subr.bf16.mxu0 0
    %104 = vmatpush1.bf16.msra.mxu0 0
    %105 = vmatprep.subr.bf16.mxu0 0
    %106 = vmatpush1.bf16.msra.mxu0 0
    %107 = vmatprep.subr.bf16.mxu0 0
    %108 = vmatpush1.bf16.msra.mxu0 0
    %109 = vmatprep.subr.bf16.mxu0 0
    %110 = vmatpush1.bf16.msra.mxu0 0
    %111 = vmatprep.subr.bf16.mxu0 0
    %112 = vmatpush1.bf16.msra.mxu0 0
    %113 = vmatprep.subr.bf16.mxu0 0
    %114 = vmatpush1.bf16.msra.mxu0 0
    %115 = vmatprep.subr.bf16.mxu0 0
    %116 = vmatpush1.bf16.msra.mxu0 0
    %117 = vmatprep.subr.bf16.mxu0 0
    %118 = vmatpush1.bf16.msra.mxu0 0
    %119 = vmatprep.subr.bf16.mxu0 0
    %120 = vmatpush1.bf16.msra.mxu0 0
    %121 = vmatprep.subr.bf16.mxu0 0
    %122 = vmatpush1.bf16.msra.mxu0 0
    %123 = vmatprep.subr.bf16.mxu0 0
    %124 = vmatpush1.bf16.msra.mxu0 0
    %125 = vmatprep.mubr.bf16.mxu0 0
    %126 = vmatmul.mubr.bf16.gmra.mrb[0].mxu0 %v91
    %v127 = vpop.f32.mrb[0].mxu0
    %v128 = vadd.f32 %v75, %v127
    %v129 = vpop.f32.mrb[0].mxu0
    %v130 = vpop.f32.mrb[0].mxu0
    %v131 = vadd.f32 %v75, %v130
    %v132 = vpop.f32.mrb[0].mxu0
    %133 = vdwg.mxu0
    %v134 = vsub.f32 0.0, %v128
    %v135 = vsub.f32 0.0, %v131
    %v136 = vmul.f32 %v134, 1.442695
    %v137 = vpow.pop %v136
    %v138 = vmul.f32 %v135, 1.442695
    %v139 = vpow.pop %v138
    %v140 = vadd.f32 %v137, 1.0
    %v141 = vadd.f32 %v139, 1.0
    %v142 = vrcp.pop %v140
    %v143 = vrcp.pop %v141
    %v144 = vmul.f32 %v128, %v142
    %v145 = vmul.f32 %v131, %v143
    %v146 = vpack.c.bf16 %v145, %v144
    %v147 = vld [vmem:[#allocation7] sm:$0xf]
    %v148 = vld [vmem:[#allocation7 + $0x4] sm:$0xf]
    %v149 = vld [vmem:[#allocation7 + $0x8] sm:$0xf]
    %v150 = vld [vmem:[#allocation7 + $0xc] sm:$0xf]
    %v151 = vld [vmem:[#allocation7 + $0x10] sm:$0xf]
    %v152 = vld [vmem:[#allocation7 + $0x14] sm:$0xf]
    %v153 = vld [vmem:[#allocation7 + $0x18] sm:$0xf]
    %v154 = vld [vmem:[#allocation7 + $0x1c] sm:$0xf]
    %v155 = vld [vmem:[#allocation7 + $0x20] sm:$0xf]
    %v156 = vld [vmem:[#allocation7 + $0x24] sm:$0xf]
    %v157 = vld [vmem:[#allocation7 + $0x28] sm:$0xf]
    %v158 = vld [vmem:[#allocation7 + $0x2c] sm:$0xf]
    %v159 = vld [vmem:[#allocation7 + $0x30] sm:$0xf]
    %v160 = vld [vmem:[#allocation7 + $0x34] sm:$0xf]
    %v161 = vld [vmem:[#allocation7 + $0x38] sm:$0xf]
    %v162 = vld [vmem:[#allocation7 + $0x3c] sm:$0xf]
    %v163 = vld [vmem:[%s4] sm:$0x1]
    %v165 = vlaneseq
    %v166 = vshrl.u32 %v165, 7
    %v167 = vsub.s32 0, %v166
    %v168 = vrot.slane %v163, %v167
    %v186 = vunpack.c.l.b16 %v147
    %v187 = vunpack.c.l.b16 %v148
    %v188 = vunpack.c.l.b16 %v149
    %v189 = vunpack.c.l.b16 %v150
    %v190 = vunpack.c.l.b16 %v151
    %v191 = vunpack.c.l.b16 %v152
    %v192 = vunpack.c.l.b16 %v153
    %v193 = vunpack.c.l.b16 %v154
    %v194 = vunpack.c.l.b16 %v155
    %v195 = vunpack.c.l.b16 %v156
    %v196 = vunpack.c.l.b16 %v157
    %v197 = vunpack.c.l.b16 %v158
    %v198 = vunpack.c.l.b16 %v159
    %v199 = vunpack.c.l.b16 %v160
    %v200 = vunpack.c.l.b16 %v161
    %v201 = vunpack.c.l.b16 %v162
    %v202 = vpack.c.b16 %v187, %v186
    %v203 = vpack.c.b16 %v189, %v188
    %v204 = vpack.c.b16 %v191, %v190
    %v205 = vpack.c.b16 %v193, %v192
    %v206 = vpack.c.b16 %v195, %v194
    %v207 = vpack.c.b16 %v197, %v196
    %v208 = vpack.c.b16 %v199, %v198
    %v209 = vpack.c.b16 %v201, %v200
    %218 = vmatprep.subr.bf16.mxu0 0
    %219 = vmatpush1.bf16.msra.mxu0 %v202
    %220 = vmatprep.subr.bf16.mxu0 0
    %221 = vmatpush1.bf16.msra.mxu0 %v203
    %222 = vmatprep.subr.bf16.mxu0 0
    %223 = vmatpush1.bf16.msra.mxu0 %v204
    %224 = vmatprep.subr.bf16.mxu0 0
    %225 = vmatpush1.bf16.msra.mxu0 %v205
    %226 = vmatprep.subr.bf16.mxu0 0
    %227 = vmatpush1.bf16.msra.mxu0 %v206
    %228 = vmatprep.subr.bf16.mxu0 0
    %229 = vmatpush1.bf16.msra.mxu0 %v207
    %230 = vmatprep.subr.bf16.mxu0 0
    %231 = vmatpush1.bf16.msra.mxu0 %v208
    %232 = vmatprep.subr.bf16.mxu0 0
    %233 = vmatpush1.bf16.msra.mxu0 %v209
    %234 = vmatprep.subr.bf16.mxu0 0
    %235 = vmatpush1.bf16.msra.mxu0 0
    %236 = vmatprep.subr.bf16.mxu0 0
    %237 = vmatpush1.bf16.msra.mxu0 0
    %238 = vmatprep.subr.bf16.mxu0 0
    %239 = vmatpush1.bf16.msra.mxu0 0
    %240 = vmatprep.subr.bf16.mxu0 0
    %241 = vmatpush1.bf16.msra.mxu0 0
    %242 = vmatprep.subr.bf16.mxu0 0
    %243 = vmatpush1.bf16.msra.mxu0 0
    %244 = vmatprep.subr.bf16.mxu0 0
    %245 = vmatpush1.bf16.msra.mxu0 0
    %246 = vmatprep.subr.bf16.mxu0 0
    %247 = vmatpush1.bf16.msra.mxu0 0
    %248 = vmatprep.subr.bf16.mxu0 0
    %249 = vmatpush1.bf16.msra.mxu0 0
    %250 = vmatprep.mubr.bf16.mxu0 0
    %251 = vmatmul.mubr.bf16.gmra.mrb[0].mxu0 %v146
    %v252 = vpop.f32.mrb[0].mxu0
    %v253 = vadd.f32 %v168, %v252
    %v254 = vpop.f32.mrb[0].mxu0
    %v255 = vpop.f32.mrb[0].mxu0
    %v256 = vadd.f32 %v168, %v255
    %v257 = vpop.f32.mrb[0].mxu0
    %258 = vdwg.mxu0
    %259 = vst [vmem:[#allocation8] sm:$0xff] %v253
    %260 = vst [vmem:[#allocation8 + $0x8] sm:$0xff] %v256
    // Predicated region
    $region34: #{_mlp_pallas_padded.1} parent=1 // pred_check
      _
    $region35: #{_mlp_pallas_padded.1} parent=1 // pred_check_branch
      %262 = sbr.rel (0) target = $region37
    $region36: #{_mlp_pallas_padded.1} parent=1 // pred_region
      %s264 = ssub.s32 256, 256
      %265 = vsyncadd [#allocation4], %s264
      %s266 = sshll.u32 [#allocation8], 4
      %s267 = int_to_ptr.vmem [resolvable:$true] %s266
      %272 = dma.vmem_to_hbm [thread:$0]  %s267, 256, %s5, [#allocation4], 128, 128, 8
    $region37: #{_mlp_pallas_padded.1} parent=1 // pred_fallthru
      _
    // Predicated region
    $region38: #{_mlp_pallas_padded.1} parent=1 // pred_check
      _
    $region39: #{_mlp_pallas_padded.1} parent=1 // pred_check_branch
      %274 = sbr.rel (0) target = $region41
    $region40: #{_mlp_pallas_padded.1} parent=1 // pred_region
      %275 = dma.done [#allocation4], 256
    $region41: #{_mlp_pallas_padded.1} parent=1 // pred_fallthru
      _
    %276 = vsyncpa [#allocation3], 1
    %277 = vsyncpa [#allocation6], 1
    %278 = vsyncpa [#allocation4], 1

</llo_original>
